<compile_context>
chip_gen: v5e
topology: v5e:2x2
jax: 0.10.0
libtpu: 0.0.40
codegen_flags: <defaults>
</compile_context>

<pallas_src>
import functools

import jax
import jax.numpy as jnp
from jax.experimental import pallas as pl
from jax.experimental.pallas import tpu as pltpu


# ---------------------------------------------------------------------------
# Pallas kernel: full recurrence + final Linear for one batch tile
# ---------------------------------------------------------------------------
def _lstm_recurrence_kernel(xg_ref, whh_ref, wlin_ref, blin_ref, out_ref, *,
                            hidden, seq_len, unroll):
    """One grid step = entire LSTM time loop for one batch tile.

    xg_ref  : (S, bt, 4H)  precomputed x @ W_ih^T + (b_ih + b_hh), gates (i,f,o,g)
    whh_ref : (H, 4H)      hidden->gates weight (transposed, gate-permuted), resident
    wlin_ref: (H, O)       final Linear weight (transposed), resident
    blin_ref: (1, O)       final Linear bias, resident
    out_ref : (bt, O)      prediction
    """
    H = hidden
    bt = out_ref.shape[0]

    # Load weights into vregs once for the whole recurrence (H*4H f32 = 16 KiB).
    whh = whh_ref[...]
    wlin = wlin_ref[...]
    mm_dtype = whh.dtype

    def step(t, carry):
        h, c = carry
        # Serial critical path: one (bt, H) x (H, 4H) MXU push per step; the
        # x-side projection was hoisted out of the loop entirely.
        gates = xg_ref[t] + jnp.dot(h.astype(mm_dtype), whh,
                                    preferred_element_type=jnp.float32)
        # Gate layout [i | f | o | g]; one contiguous (bt, 3H) sigmoid via tanh.
        sig = 0.5 * (jnp.tanh(0.5 * gates[:, : 3 * H]) + 1.0)
        i_g = sig[:, 0 * H:1 * H]
        f_g = sig[:, 1 * H:2 * H]
        o_g = sig[:, 2 * H:3 * H]
        g_g = jnp.tanh(gates[:, 3 * H:4 * H])
        c = f_g * c + i_g * g_g
        h = o_g * jnp.tanh(c)
        return h, c

    h0 = jnp.zeros((bt, H), jnp.float32)
    c0 = jnp.zeros((bt, H), jnp.float32)
    h_T, _ = jax.lax.fori_loop(0, seq_len, step, (h0, c0), unroll=unroll)

    # Fused final Linear on output[:, -1, :] == h_T.
    out_ref[...] = (
        jnp.dot(h_T.astype(wlin.dtype), wlin, preferred_element_type=jnp.float32)
        + blin_ref[...]
    ).astype(out_ref.dtype)


# ---------------------------------------------------------------------------
# Wrapper (pallas_call plumbing)
# ---------------------------------------------------------------------------
def _permute_gate_rows(w):
    """Rows in PyTorch gate order (i, f, g, o) -> (i, f, o, g)."""
    H = w.shape[0] // 4
    return jnp.concatenate([w[:H], w[H:2 * H], w[3 * H:4 * H], w[2 * H:3 * H]],
                           axis=0)


def simple_lstm_forward(x4d, params, *, time_index=11, batch_tile=None,
                        matmul_dtype=None):
    """x4d: (B, T0, S, F) -> pred: (B, O).  Matches SimpleLSTM.forward."""
    assert x4d.shape[1] > time_index, "dim 1 must be > 11 (module slices x[:, 11])"
    xs = x4d[:, time_index, :, :]                          # (B, S, F)
    B, S, F = xs.shape
    H = params["w_hh"].shape[1]
    G = 4 * H
    O = params["w_lin"].shape[0]

    # Batch tiling: default = whole batch; split over v7x's two TensorCores
    # when the halves stay sublane-aligned (multiple of 8 rows per tile).
    if batch_tile is None:
        bt = B // 2 if (B >= 16 and (B // 2) % 8 == 0) else B
    else:
        bt = batch_tile
    assert B % bt == 0, "batch_tile must divide batch"
    assert bt == B or bt % 8 == 0, "partial batch tiles must be multiples of 8"
    nb = B // bt

    # One-time parameter massaging (XLA, outside the hot loop): gate-permute,
    # transpose, and fold the summed LSTM biases into the x projection.
    f32 = jnp.float32
    w_ih = _permute_gate_rows(params["w_ih"]).astype(f32)          # (4H, F)
    w_hh = _permute_gate_rows(params["w_hh"]).astype(f32)          # (4H, H)
    bias = _permute_gate_rows(params["b_ih"] + params["b_hh"]).astype(f32)  # (4H,)

    # Input projection for ALL timesteps: no recurrent dependence, so one
    # batched matmul here.  Output is time-major and lane-dense (S, B, 4H=128)
    # so each batch tile is a single full-line-efficiency DMA.
    xg = jnp.einsum("bsf,gf->sbg", xs.astype(f32), w_ih) + bias    # (S, B, 4H)

    whh_t = w_hh.T                                                 # (H, 4H)
    wlin_t = params["w_lin"].T.astype(f32)                         # (H, O)
    blin = params["b_lin"].reshape(1, O).astype(f32)               # (1, O)

    if matmul_dtype is not None:       # e.g. jnp.bfloat16 on v6e/v7x production
        xg = xg.astype(matmul_dtype)
        whh_t = whh_t.astype(matmul_dtype)
        wlin_t = wlin_t.astype(matmul_dtype)

    # VMEM: double-buffered xg tile is 2*S*bt*4H*itemsize bytes; keep it well
    # under the default scoped limit (32 MiB) -- chunk the time axis if S*bt
    # ever grows beyond that (matters most on v7x's 64 MiB VMEM).
    unroll = True if S <= 32 else 4    # full unroll for short static S

    kern = functools.partial(_lstm_recurrence_kernel,
                             hidden=H, seq_len=S, unroll=unroll)
    return pl.pallas_call(
        kern,
        out_shape=jax.ShapeDtypeStruct((B, O), xs.dtype),
        grid=(nb,),
        in_specs=[
            pl.BlockSpec((S, bt, G), lambda bi: (0, bi, 0)),   # projected x slab
            pl.BlockSpec((H, G), lambda bi: (0, 0)),           # W_hh^T (resident)
            pl.BlockSpec((H, O), lambda bi: (0, 0)),           # W_lin^T (resident)
            pl.BlockSpec((1, O), lambda bi: (0, 0)),           # b_lin (resident)
        ],
        out_specs=pl.BlockSpec((bt, O), lambda bi: (bi, 0)),
        compiler_params=pltpu.CompilerParams(
            dimension_semantics=("parallel",)),
    )(xg, whh_t, wlin_t, blin)


# ---------------------------------------------------------------------------
# Parameter init (deterministic, PyTorch-style uniform(-1/sqrt(H), 1/sqrt(H)))
# ---------------------------------------------------------------------------
def init_simple_lstm_params(key, input_size, hidden_size, output_size=1):
    ks = jax.random.split(key, 6)
    b = 1.0 / (hidden_size ** 0.5)
    return dict(
        w_ih=jax.random.uniform(ks[0], (4 * hidden_size, input_size), jnp.float32, -b, b),
        w_hh=jax.random.uniform(ks[1], (4 * hidden_size, hidden_size), jnp.float32, -b, b),
        b_ih=jax.random.uniform(ks[2], (4 * hidden_size,), jnp.float32, -b, b),
        b_hh=jax.random.uniform(ks[3], (4 * hidden_size,), jnp.float32, -b, b),
        w_lin=jax.random.uniform(ks[4], (output_size, hidden_size), jnp.float32, -b, b),
        b_lin=jax.random.uniform(ks[5], (output_size,), jnp.float32, -b, b),
    )


# ---------------------------------------------------------------------------
# Pure-JAX reference (PyTorch gate order, for correctness check)
# ---------------------------------------------------------------------------
def reference_forward(x4d, params, *, time_index=11):
    xs = x4d[:, time_index, :, :]                          # (B, S, F)
    B = xs.shape[0]
    H = params["w_hh"].shape[1]
    w_ih, w_hh = params["w_ih"], params["w_hh"]
    b_all = params["b_ih"] + params["b_hh"]

    def step(carry, x_t):
        h, c = carry
        gates = x_t @ w_ih.T + h @ w_hh.T + b_all
        i = jax.nn.sigmoid(gates[:, 0 * H:1 * H])
        f = jax.nn.sigmoid(gates[:, 1 * H:2 * H])
        g = jnp.tanh(gates[:, 2 * H:3 * H])
        o = jax.nn.sigmoid(gates[:, 3 * H:4 * H])
        c = f * c + i * g
        h = o * jnp.tanh(c)
        return (h, c), None

    xt = jnp.transpose(xs, (1, 0, 2))                      # (S, B, F)
    h0 = jnp.zeros((B, H), jnp.float32)
    c0 = jnp.zeros((B, H), jnp.float32)
    (h_T, _), _ = jax.lax.scan(step, (h0, c0), xt)
    return h_T @ params["w_lin"].T + params["b_lin"]


# ---------------------------------------------------------------------------
if __name__ == "__main__":
    # x: (batch=2, 16, seq=8, input_size=4); hidden=32 -> 4H = 128 lanes.
    B, T0, S, F = 2, 16, 8, 4
    H, O = 32, 1

    key = jax.random.PRNGKey(0)
    k_x, k_p = jax.random.split(key)
    x = jax.random.normal(k_x, (B, T0, S, F), jnp.float32)
    params = init_simple_lstm_params(k_p, F, H, O)

    pred = jax.block_until_ready(simple_lstm_forward(x, params))

    ref = reference_forward(x, params)
    assert pred.shape == (B, O), pred.shape
    assert jnp.allclose(pred, ref, atol=1e-4, rtol=1e-4), \
        f"max abs err {jnp.max(jnp.abs(pred - ref))}"

    print("KERNEL_OK")
</pallas_src>

<mosaic_0001>
module attributes {stable_mosaic.version = 11 : i64} {
  func.func @_lstm_recurrence_kernel(%arg0: i32, %arg1: memref<8x2x128xf32, #tpu.memory_space<vmem>>, %arg2: memref<32x128xf32, #tpu.memory_space<vmem>>, %arg3: memref<32x1xf32, #tpu.memory_space<vmem>>, %arg4: memref<1x1xf32, #tpu.memory_space<vmem>>, %arg5: memref<2x1xf32, #tpu.memory_space<vmem>>) attributes {dimension_semantics = [#tpu.dimension_semantics<parallel>], iteration_bounds = array<i64: 1>, scalar_prefetch = 0 : i64, scratch_operands = 0 : i64, tpu.core_type = #tpu.core_type<tc>, window_params = [{transform_indices = @transform_0, window_bounds = array<i64: 8, 2, 128>}, {pipeline_mode = #tpu.pipeline_mode<synchronous>, transform_indices = @transform_1, window_bounds = array<i64: 32, 128>}, {pipeline_mode = #tpu.pipeline_mode<synchronous>, transform_indices = @transform_2, window_bounds = array<i64: 32, 1>}, {pipeline_mode = #tpu.pipeline_mode<synchronous>, transform_indices = @transform_3, window_bounds = array<i64: 1, 1>}, {transform_indices = @transform_4, window_bounds = array<i64: 2, 1>}]} {
    %c0 = arith.constant 0 : index
    %c0_0 = arith.constant 0 : index
    %0 = vector.load %arg2[%c0, %c0_0] : memref<32x128xf32, #tpu.memory_space<vmem>>, vector<32x128xf32>
    %c0_1 = arith.constant 0 : index
    %c0_2 = arith.constant 0 : index
    %1 = vector.load %arg3[%c0_1, %c0_2] : memref<32x1xf32, #tpu.memory_space<vmem>>, vector<32x1xf32>
    %cst = arith.constant 0.000000e+00 : f32
    %2 = vector.broadcast %cst : f32 to vector<2x32xf32>
    %cst_3 = arith.constant 0.000000e+00 : f32
    %3 = vector.broadcast %cst_3 : f32 to vector<2x32xf32>
    %c0_i32 = arith.constant 0 : i32
    %4 = arith.index_cast %c0_i32 : i32 to index
    %c0_4 = arith.constant 0 : index
    %c0_5 = arith.constant 0 : index
    %5 = vector.load %arg1[%4, %c0_4, %c0_5] : memref<8x2x128xf32, #tpu.memory_space<vmem>>, vector<1x2x128xf32>
    %6 = vector.shape_cast %5 : vector<1x2x128xf32> to vector<2x128xf32>
    %cst_6 = arith.constant dense<0.000000e+00> : vector<2x128xf32>
    %7 = tpu.matmul %2, %0, %cst_6 {dimension_numbers = #tpu.dot_dimension_numbers<[1], [0], [0], [1], [0, 0, 1, 1], [], []>} : vector<2x32xf32>, vector<32x128xf32>, vector<2x128xf32> -> vector<2x128xf32>
    %8 = arith.addf %6, %7 : vector<2x128xf32>
    %9 = vector.extract_strided_slice %8 {offsets = [0, 0], sizes = [2, 96], strides = [1, 1]} : vector<2x128xf32> to vector<2x96xf32>
    %cst_7 = arith.constant 5.000000e-01 : f32
    %10 = vector.broadcast %cst_7 : f32 to vector<2x96xf32>
    %11 = arith.mulf %10, %9 : vector<2x96xf32>
    %12 = math.tanh %11 : vector<2x96xf32>
    %cst_8 = arith.constant 1.000000e+00 : f32
    %13 = vector.broadcast %cst_8 : f32 to vector<2x96xf32>
    %14 = arith.addf %12, %13 : vector<2x96xf32>
    %cst_9 = arith.constant 5.000000e-01 : f32
    %15 = vector.broadcast %cst_9 : f32 to vector<2x96xf32>
    %16 = arith.mulf %15, %14 : vector<2x96xf32>
    %17 = vector.extract_strided_slice %16 {offsets = [0, 0], sizes = [2, 32], strides = [1, 1]} : vector<2x96xf32> to vector<2x32xf32>
    %18 = vector.extract_strided_slice %16 {offsets = [0, 32], sizes = [2, 32], strides = [1, 1]} : vector<2x96xf32> to vector<2x32xf32>
    %19 = vector.extract_strided_slice %16 {offsets = [0, 64], sizes = [2, 32], strides = [1, 1]} : vector<2x96xf32> to vector<2x32xf32>
    %20 = vector.extract_strided_slice %8 {offsets = [0, 96], sizes = [2, 32], strides = [1, 1]} : vector<2x128xf32> to vector<2x32xf32>
    %21 = math.tanh %20 : vector<2x32xf32>
    %22 = arith.mulf %18, %3 : vector<2x32xf32>
    %23 = arith.mulf %17, %21 : vector<2x32xf32>
    %24 = arith.addf %22, %23 : vector<2x32xf32>
    %25 = math.tanh %24 : vector<2x32xf32>
    %26 = arith.mulf %19, %25 : vector<2x32xf32>
    %c1_i32 = arith.constant 1 : i32
    %27 = arith.index_cast %c1_i32 : i32 to index
    %c0_10 = arith.constant 0 : index
    %c0_11 = arith.constant 0 : index
    %28 = vector.load %arg1[%27, %c0_10, %c0_11] : memref<8x2x128xf32, #tpu.memory_space<vmem>>, vector<1x2x128xf32>
    %29 = vector.shape_cast %28 : vector<1x2x128xf32> to vector<2x128xf32>
    %cst_12 = arith.constant dense<0.000000e+00> : vector<2x128xf32>
    %30 = tpu.matmul %26, %0, %cst_12 {dimension_numbers = #tpu.dot_dimension_numbers<[1], [0], [0], [1], [0, 0, 1, 1], [], []>} : vector<2x32xf32>, vector<32x128xf32>, vector<2x128xf32> -> vector<2x128xf32>
    %31 = arith.addf %29, %30 : vector<2x128xf32>
    %32 = vector.extract_strided_slice %31 {offsets = [0, 0], sizes = [2, 96], strides = [1, 1]} : vector<2x128xf32> to vector<2x96xf32>
    %cst_13 = arith.constant 5.000000e-01 : f32
    %33 = vector.broadcast %cst_13 : f32 to vector<2x96xf32>
    %34 = arith.mulf %33, %32 : vector<2x96xf32>
    %35 = math.tanh %34 : vector<2x96xf32>
    %cst_14 = arith.constant 1.000000e+00 : f32
    %36 = vector.broadcast %cst_14 : f32 to vector<2x96xf32>
    %37 = arith.addf %35, %36 : vector<2x96xf32>
    %cst_15 = arith.constant 5.000000e-01 : f32
    %38 = vector.broadcast %cst_15 : f32 to vector<2x96xf32>
    %39 = arith.mulf %38, %37 : vector<2x96xf32>
    %40 = vector.extract_strided_slice %39 {offsets = [0, 0], sizes = [2, 32], strides = [1, 1]} : vector<2x96xf32> to vector<2x32xf32>
    %41 = vector.extract_strided_slice %39 {offsets = [0, 32], sizes = [2, 32], strides = [1, 1]} : vector<2x96xf32> to vector<2x32xf32>
    %42 = vector.extract_strided_slice %39 {offsets = [0, 64], sizes = [2, 32], strides = [1, 1]} : vector<2x96xf32> to vector<2x32xf32>
    %43 = vector.extract_strided_slice %31 {offsets = [0, 96], sizes = [2, 32], strides = [1, 1]} : vector<2x128xf32> to vector<2x32xf32>
    %44 = math.tanh %43 : vector<2x32xf32>
    %45 = arith.mulf %41, %24 : vector<2x32xf32>
    %46 = arith.mulf %40, %44 : vector<2x32xf32>
    %47 = arith.addf %45, %46 : vector<2x32xf32>
    %48 = math.tanh %47 : vector<2x32xf32>
    %49 = arith.mulf %42, %48 : vector<2x32xf32>
    %c2_i32 = arith.constant 2 : i32
    %50 = arith.index_cast %c2_i32 : i32 to index
    %c0_16 = arith.constant 0 : index
    %c0_17 = arith.constant 0 : index
    %51 = vector.load %arg1[%50, %c0_16, %c0_17] : memref<8x2x128xf32, #tpu.memory_space<vmem>>, vector<1x2x128xf32>
    %52 = vector.shape_cast %51 : vector<1x2x128xf32> to vector<2x128xf32>
    %cst_18 = arith.constant dense<0.000000e+00> : vector<2x128xf32>
    %53 = tpu.matmul %49, %0, %cst_18 {dimension_numbers = #tpu.dot_dimension_numbers<[1], [0], [0], [1], [0, 0, 1, 1], [], []>} : vector<2x32xf32>, vector<32x128xf32>, vector<2x128xf32> -> vector<2x128xf32>
    %54 = arith.addf %52, %53 : vector<2x128xf32>
    %55 = vector.extract_strided_slice %54 {offsets = [0, 0], sizes = [2, 96], strides = [1, 1]} : vector<2x128xf32> to vector<2x96xf32>
    %cst_19 = arith.constant 5.000000e-01 : f32
    %56 = vector.broadcast %cst_19 : f32 to vector<2x96xf32>
    %57 = arith.mulf %56, %55 : vector<2x96xf32>
    %58 = math.tanh %57 : vector<2x96xf32>
    %cst_20 = arith.constant 1.000000e+00 : f32
    %59 = vector.broadcast %cst_20 : f32 to vector<2x96xf32>
    %60 = arith.addf %58, %59 : vector<2x96xf32>
    %cst_21 = arith.constant 5.000000e-01 : f32
    %61 = vector.broadcast %cst_21 : f32 to vector<2x96xf32>
    %62 = arith.mulf %61, %60 : vector<2x96xf32>
    %63 = vector.extract_strided_slice %62 {offsets = [0, 0], sizes = [2, 32], strides = [1, 1]} : vector<2x96xf32> to vector<2x32xf32>
    %64 = vector.extract_strided_slice %62 {offsets = [0, 32], sizes = [2, 32], strides = [1, 1]} : vector<2x96xf32> to vector<2x32xf32>
    %65 = vector.extract_strided_slice %62 {offsets = [0, 64], sizes = [2, 32], strides = [1, 1]} : vector<2x96xf32> to vector<2x32xf32>
    %66 = vector.extract_strided_slice %54 {offsets = [0, 96], sizes = [2, 32], strides = [1, 1]} : vector<2x128xf32> to vector<2x32xf32>
    %67 = math.tanh %66 : vector<2x32xf32>
    %68 = arith.mulf %64, %47 : vector<2x32xf32>
    %69 = arith.mulf %63, %67 : vector<2x32xf32>
    %70 = arith.addf %68, %69 : vector<2x32xf32>
    %71 = math.tanh %70 : vector<2x32xf32>
    %72 = arith.mulf %65, %71 : vector<2x32xf32>
    %c3_i32 = arith.constant 3 : i32
    %73 = arith.index_cast %c3_i32 : i32 to index
    %c0_22 = arith.constant 0 : index
    %c0_23 = arith.constant 0 : index
    %74 = vector.load %arg1[%73, %c0_22, %c0_23] : memref<8x2x128xf32, #tpu.memory_space<vmem>>, vector<1x2x128xf32>
    %75 = vector.shape_cast %74 : vector<1x2x128xf32> to vector<2x128xf32>
    %cst_24 = arith.constant dense<0.000000e+00> : vector<2x128xf32>
    %76 = tpu.matmul %72, %0, %cst_24 {dimension_numbers = #tpu.dot_dimension_numbers<[1], [0], [0], [1], [0, 0, 1, 1], [], []>} : vector<2x32xf32>, vector<32x128xf32>, vector<2x128xf32> -> vector<2x128xf32>
    %77 = arith.addf %75, %76 : vector<2x128xf32>
    %78 = vector.extract_strided_slice %77 {offsets = [0, 0], sizes = [2, 96], strides = [1, 1]} : vector<2x128xf32> to vector<2x96xf32>
    %cst_25 = arith.constant 5.000000e-01 : f32
    %79 = vector.broadcast %cst_25 : f32 to vector<2x96xf32>
    %80 = arith.mulf %79, %78 : vector<2x96xf32>
    %81 = math.tanh %80 : vector<2x96xf32>
    %cst_26 = arith.constant 1.000000e+00 : f32
    %82 = vector.broadcast %cst_26 : f32 to vector<2x96xf32>
    %83 = arith.addf %81, %82 : vector<2x96xf32>
    %cst_27 = arith.constant 5.000000e-01 : f32
    %84 = vector.broadcast %cst_27 : f32 to vector<2x96xf32>
    %85 = arith.mulf %84, %83 : vector<2x96xf32>
    %86 = vector.extract_strided_slice %85 {offsets = [0, 0], sizes = [2, 32], strides = [1, 1]} : vector<2x96xf32> to vector<2x32xf32>
    %87 = vector.extract_strided_slice %85 {offsets = [0, 32], sizes = [2, 32], strides = [1, 1]} : vector<2x96xf32> to vector<2x32xf32>
    %88 = vector.extract_strided_slice %85 {offsets = [0, 64], sizes = [2, 32], strides = [1, 1]} : vector<2x96xf32> to vector<2x32xf32>
    %89 = vector.extract_strided_slice %77 {offsets = [0, 96], sizes = [2, 32], strides = [1, 1]} : vector<2x128xf32> to vector<2x32xf32>
    %90 = math.tanh %89 : vector<2x32xf32>
    %91 = arith.mulf %87, %70 : vector<2x32xf32>
    %92 = arith.mulf %86, %90 : vector<2x32xf32>
    %93 = arith.addf %91, %92 : vector<2x32xf32>
    %94 = math.tanh %93 : vector<2x32xf32>
    %95 = arith.mulf %88, %94 : vector<2x32xf32>
    %c4_i32 = arith.constant 4 : i32
    %96 = arith.index_cast %c4_i32 : i32 to index
    %c0_28 = arith.constant 0 : index
    %c0_29 = arith.constant 0 : index
    %97 = vector.load %arg1[%96, %c0_28, %c0_29] : memref<8x2x128xf32, #tpu.memory_space<vmem>>, vector<1x2x128xf32>
    %98 = vector.shape_cast %97 : vector<1x2x128xf32> to vector<2x128xf32>
    %cst_30 = arith.constant dense<0.000000e+00> : vector<2x128xf32>
    %99 = tpu.matmul %95, %0, %cst_30 {dimension_numbers = #tpu.dot_dimension_numbers<[1], [0], [0], [1], [0, 0, 1, 1], [], []>} : vector<2x32xf32>, vector<32x128xf32>, vector<2x128xf32> -> vector<2x128xf32>
    %100 = arith.addf %98, %99 : vector<2x128xf32>
    %101 = vector.extract_strided_slice %100 {offsets = [0, 0], sizes = [2, 96], strides = [1, 1]} : vector<2x128xf32> to vector<2x96xf32>
    %cst_31 = arith.constant 5.000000e-01 : f32
    %102 = vector.broadcast %cst_31 : f32 to vector<2x96xf32>
    %103 = arith.mulf %102, %101 : vector<2x96xf32>
    %104 = math.tanh %103 : vector<2x96xf32>
    %cst_32 = arith.constant 1.000000e+00 : f32
    %105 = vector.broadcast %cst_32 : f32 to vector<2x96xf32>
    %106 = arith.addf %104, %105 : vector<2x96xf32>
    %cst_33 = arith.constant 5.000000e-01 : f32
    %107 = vector.broadcast %cst_33 : f32 to vector<2x96xf32>
    %108 = arith.mulf %107, %106 : vector<2x96xf32>
    %109 = vector.extract_strided_slice %108 {offsets = [0, 0], sizes = [2, 32], strides = [1, 1]} : vector<2x96xf32> to vector<2x32xf32>
    %110 = vector.extract_strided_slice %108 {offsets = [0, 32], sizes = [2, 32], strides = [1, 1]} : vector<2x96xf32> to vector<2x32xf32>
    %111 = vector.extract_strided_slice %108 {offsets = [0, 64], sizes = [2, 32], strides = [1, 1]} : vector<2x96xf32> to vector<2x32xf32>
    %112 = vector.extract_strided_slice %100 {offsets = [0, 96], sizes = [2, 32], strides = [1, 1]} : vector<2x128xf32> to vector<2x32xf32>
    %113 = math.tanh %112 : vector<2x32xf32>
    %114 = arith.mulf %110, %93 : vector<2x32xf32>
    %115 = arith.mulf %109, %113 : vector<2x32xf32>
    %116 = arith.addf %114, %115 : vector<2x32xf32>
    %117 = math.tanh %116 : vector<2x32xf32>
    %118 = arith.mulf %111, %117 : vector<2x32xf32>
    %c5_i32 = arith.constant 5 : i32
    %119 = arith.index_cast %c5_i32 : i32 to index
    %c0_34 = arith.constant 0 : index
    %c0_35 = arith.constant 0 : index
    %120 = vector.load %arg1[%119, %c0_34, %c0_35] : memref<8x2x128xf32, #tpu.memory_space<vmem>>, vector<1x2x128xf32>
    %121 = vector.shape_cast %120 : vector<1x2x128xf32> to vector<2x128xf32>
    %cst_36 = arith.constant dense<0.000000e+00> : vector<2x128xf32>
    %122 = tpu.matmul %118, %0, %cst_36 {dimension_numbers = #tpu.dot_dimension_numbers<[1], [0], [0], [1], [0, 0, 1, 1], [], []>} : vector<2x32xf32>, vector<32x128xf32>, vector<2x128xf32> -> vector<2x128xf32>
    %123 = arith.addf %121, %122 : vector<2x128xf32>
    %124 = vector.extract_strided_slice %123 {offsets = [0, 0], sizes = [2, 96], strides = [1, 1]} : vector<2x128xf32> to vector<2x96xf32>
    %cst_37 = arith.constant 5.000000e-01 : f32
    %125 = vector.broadcast %cst_37 : f32 to vector<2x96xf32>
    %126 = arith.mulf %125, %124 : vector<2x96xf32>
    %127 = math.tanh %126 : vector<2x96xf32>
    %cst_38 = arith.constant 1.000000e+00 : f32
    %128 = vector.broadcast %cst_38 : f32 to vector<2x96xf32>
    %129 = arith.addf %127, %128 : vector<2x96xf32>
    %cst_39 = arith.constant 5.000000e-01 : f32
    %130 = vector.broadcast %cst_39 : f32 to vector<2x96xf32>
    %131 = arith.mulf %130, %129 : vector<2x96xf32>
    %132 = vector.extract_strided_slice %131 {offsets = [0, 0], sizes = [2, 32], strides = [1, 1]} : vector<2x96xf32> to vector<2x32xf32>
    %133 = vector.extract_strided_slice %131 {offsets = [0, 32], sizes = [2, 32], strides = [1, 1]} : vector<2x96xf32> to vector<2x32xf32>
    %134 = vector.extract_strided_slice %131 {offsets = [0, 64], sizes = [2, 32], strides = [1, 1]} : vector<2x96xf32> to vector<2x32xf32>
    %135 = vector.extract_strided_slice %123 {offsets = [0, 96], sizes = [2, 32], strides = [1, 1]} : vector<2x128xf32> to vector<2x32xf32>
    %136 = math.tanh %135 : vector<2x32xf32>
    %137 = arith.mulf %133, %116 : vector<2x32xf32>
    %138 = arith.mulf %132, %136 : vector<2x32xf32>
    %139 = arith.addf %137, %138 : vector<2x32xf32>
    %140 = math.tanh %139 : vector<2x32xf32>
    %141 = arith.mulf %134, %140 : vector<2x32xf32>
    %c6_i32 = arith.constant 6 : i32
    %142 = arith.index_cast %c6_i32 : i32 to index
    %c0_40 = arith.constant 0 : index
    %c0_41 = arith.constant 0 : index
    %143 = vector.load %arg1[%142, %c0_40, %c0_41] : memref<8x2x128xf32, #tpu.memory_space<vmem>>, vector<1x2x128xf32>
    %144 = vector.shape_cast %143 : vector<1x2x128xf32> to vector<2x128xf32>
    %cst_42 = arith.constant dense<0.000000e+00> : vector<2x128xf32>
    %145 = tpu.matmul %141, %0, %cst_42 {dimension_numbers = #tpu.dot_dimension_numbers<[1], [0], [0], [1], [0, 0, 1, 1], [], []>} : vector<2x32xf32>, vector<32x128xf32>, vector<2x128xf32> -> vector<2x128xf32>
    %146 = arith.addf %144, %145 : vector<2x128xf32>
    %147 = vector.extract_strided_slice %146 {offsets = [0, 0], sizes = [2, 96], strides = [1, 1]} : vector<2x128xf32> to vector<2x96xf32>
    %cst_43 = arith.constant 5.000000e-01 : f32
    %148 = vector.broadcast %cst_43 : f32 to vector<2x96xf32>
    %149 = arith.mulf %148, %147 : vector<2x96xf32>
    %150 = math.tanh %149 : vector<2x96xf32>
    %cst_44 = arith.constant 1.000000e+00 : f32
    %151 = vector.broadcast %cst_44 : f32 to vector<2x96xf32>
    %152 = arith.addf %150, %151 : vector<2x96xf32>
    %cst_45 = arith.constant 5.000000e-01 : f32
    %153 = vector.broadcast %cst_45 : f32 to vector<2x96xf32>
    %154 = arith.mulf %153, %152 : vector<2x96xf32>
    %155 = vector.extract_strided_slice %154 {offsets = [0, 0], sizes = [2, 32], strides = [1, 1]} : vector<2x96xf32> to vector<2x32xf32>
    %156 = vector.extract_strided_slice %154 {offsets = [0, 32], sizes = [2, 32], strides = [1, 1]} : vector<2x96xf32> to vector<2x32xf32>
    %157 = vector.extract_strided_slice %154 {offsets = [0, 64], sizes = [2, 32], strides = [1, 1]} : vector<2x96xf32> to vector<2x32xf32>
    %158 = vector.extract_strided_slice %146 {offsets = [0, 96], sizes = [2, 32], strides = [1, 1]} : vector<2x128xf32> to vector<2x32xf32>
    %159 = math.tanh %158 : vector<2x32xf32>
    %160 = arith.mulf %156, %139 : vector<2x32xf32>
    %161 = arith.mulf %155, %159 : vector<2x32xf32>
    %162 = arith.addf %160, %161 : vector<2x32xf32>
    %163 = math.tanh %162 : vector<2x32xf32>
    %164 = arith.mulf %157, %163 : vector<2x32xf32>
    %c7_i32 = arith.constant 7 : i32
    %165 = arith.index_cast %c7_i32 : i32 to index
    %c0_46 = arith.constant 0 : index
    %c0_47 = arith.constant 0 : index
    %166 = vector.load %arg1[%165, %c0_46, %c0_47] : memref<8x2x128xf32, #tpu.memory_space<vmem>>, vector<1x2x128xf32>
    %167 = vector.shape_cast %166 : vector<1x2x128xf32> to vector<2x128xf32>
    %cst_48 = arith.constant dense<0.000000e+00> : vector<2x128xf32>
    %168 = tpu.matmul %164, %0, %cst_48 {dimension_numbers = #tpu.dot_dimension_numbers<[1], [0], [0], [1], [0, 0, 1, 1], [], []>} : vector<2x32xf32>, vector<32x128xf32>, vector<2x128xf32> -> vector<2x128xf32>
    %169 = arith.addf %167, %168 : vector<2x128xf32>
    %170 = vector.extract_strided_slice %169 {offsets = [0, 0], sizes = [2, 96], strides = [1, 1]} : vector<2x128xf32> to vector<2x96xf32>
    %cst_49 = arith.constant 5.000000e-01 : f32
    %171 = vector.broadcast %cst_49 : f32 to vector<2x96xf32>
    %172 = arith.mulf %171, %170 : vector<2x96xf32>
    %173 = math.tanh %172 : vector<2x96xf32>
    %cst_50 = arith.constant 1.000000e+00 : f32
    %174 = vector.broadcast %cst_50 : f32 to vector<2x96xf32>
    %175 = arith.addf %173, %174 : vector<2x96xf32>
    %cst_51 = arith.constant 5.000000e-01 : f32
    %176 = vector.broadcast %cst_51 : f32 to vector<2x96xf32>
    %177 = arith.mulf %176, %175 : vector<2x96xf32>
    %178 = vector.extract_strided_slice %177 {offsets = [0, 0], sizes = [2, 32], strides = [1, 1]} : vector<2x96xf32> to vector<2x32xf32>
    %179 = vector.extract_strided_slice %177 {offsets = [0, 32], sizes = [2, 32], strides = [1, 1]} : vector<2x96xf32> to vector<2x32xf32>
    %180 = vector.extract_strided_slice %177 {offsets = [0, 64], sizes = [2, 32], strides = [1, 1]} : vector<2x96xf32> to vector<2x32xf32>
    %181 = vector.extract_strided_slice %169 {offsets = [0, 96], sizes = [2, 32], strides = [1, 1]} : vector<2x128xf32> to vector<2x32xf32>
    %182 = math.tanh %181 : vector<2x32xf32>
    %183 = arith.mulf %179, %162 : vector<2x32xf32>
    %184 = arith.mulf %178, %182 : vector<2x32xf32>
    %185 = arith.addf %183, %184 : vector<2x32xf32>
    %186 = math.tanh %185 : vector<2x32xf32>
    %187 = arith.mulf %180, %186 : vector<2x32xf32>
    %c8_i32 = arith.constant 8 : i32
    %cst_52 = arith.constant dense<0.000000e+00> : vector<2x1xf32>
    %188 = tpu.matmul %187, %1, %cst_52 {dimension_numbers = #tpu.dot_dimension_numbers<[1], [0], [0], [1], [0, 0, 1, 1], [], []>} : vector<2x32xf32>, vector<32x1xf32>, vector<2x1xf32> -> vector<2x1xf32>
    %c0_53 = arith.constant 0 : index
    %c0_54 = arith.constant 0 : index
    %189 = vector.load %arg4[%c0_53, %c0_54] : memref<1x1xf32, #tpu.memory_space<vmem>>, vector<1x1xf32>
    %190 = vector.broadcast %189 : vector<1x1xf32> to vector<2x1xf32>
    %191 = arith.addf %188, %190 : vector<2x1xf32>
    %c0_55 = arith.constant 0 : index
    %c0_56 = arith.constant 0 : index
    %192 = vector.load %arg5[%c0_55, %c0_56] : memref<2x1xf32, #tpu.memory_space<vmem>>, vector<2x1xf32>
    tpu.vector_store %arg5[%c0_55, %c0_56], %191 {strides = array<i32>} : memref<2x1xf32, #tpu.memory_space<vmem>>, vector<2x1xf32>,
    return
  }
  func.func @transform_0(%arg0: i32) -> (i32, i32, i32) {
    %c0_i32 = arith.constant 0 : i32
    %c0_i32_0 = arith.constant 0 : i32
    %c0_i32_1 = arith.constant 0 : i32
    return %c0_i32, %arg0, %c0_i32_0 : i32, i32, i32
  }
  func.func @transform_1(%arg0: i32) -> (i32, i32) {
    %c0_i32 = arith.constant 0 : i32
    %c0_i32_0 = arith.constant 0 : i32
    %c0_i32_1 = arith.constant 0 : i32
    return %c0_i32, %c0_i32_0 : i32, i32
  }
  func.func @transform_2(%arg0: i32) -> (i32, i32) {
    %c0_i32 = arith.constant 0 : i32
    %c0_i32_0 = arith.constant 0 : i32
    %c0_i32_1 = arith.constant 0 : i32
    return %c0_i32, %c0_i32_0 : i32, i32
  }
  func.func @transform_3(%arg0: i32) -> (i32, i32) {
    %c0_i32 = arith.constant 0 : i32
    %c0_i32_0 = arith.constant 0 : i32
    %c0_i32_1 = arith.constant 0 : i32
    return %c0_i32, %c0_i32_0 : i32, i32
  }
  func.func @transform_4(%arg0: i32) -> (i32, i32) {
    %c0_i32 = arith.constant 0 : i32
    %c0_i32_0 = arith.constant 0 : i32
    return %arg0, %c0_i32 : i32, i32
  }
}

</mosaic_0001>

<llo_original>
// kernel: tpu_custom_call.1
$region0: #{tpu_custom_call.1}
  #allocation0 [shape = 'u32[]', space=smem, size = 0x4, offset = 0x4, fixed_abs, tag = 'smem constant byte address 0x4 - core index']
  #allocation1 [shape = 'u32[72,128]{1,0:T(1,128)}', space=vmem, size = 0x9000, scoped, tag = 'internal scratch']
  #allocation2 [shape = 'f32[1,1]{1,0:T(1,128)S(1)}', space=vmem, size = 0x200, scoped, tag = 'scoped memory for tpu_custom_call.1']
  %s0 = inlined_call_operand.hbm [shape: f32[8,2,128], index: 0, kind: input, shape index: {}]
  %s1 = inlined_call_operand.vmem [shape: f32[32,128], index: 1, kind: input, shape index: {}]
  %s2 = inlined_call_operand.vmem [shape: f32[32,1], index: 2, kind: input, shape index: {}]
  %s3 = inlined_call_operand.<no memory space> [shape: f32[1,1], index: 3, kind: input, shape index: {}]
  %s4 = inlined_call_operand.vmem [shape: f32[2,1], index: 4, kind: output, shape index: {}]
  %s5 = sld [smem:[#allocation0]]
  $region30: #{tpu_custom_call.1} parent=0
    _
  %s7 = ssub.s32 1, %s5
  %s8 = scalar_select 0, %s7, %s5
  %v9 = vstv %s3
  %10 = vst [vmem:[#allocation2] sm:$0x1] %v9
  $region1: #{tpu_custom_call.1} parent=0
    #allocation3 [shape = 'u8[8192]{0}', space=vmem, size = 0x2000, scoped, tag = 'input window, operand 0, single buffered']
    #allocation4 [shape = 's32[1]{0}', space=sflag, size = 0x4, scoped, tag = 'scoped memory for tpu_custom_call.1']
    %11 = vsyncpa [#allocation4], 0
    // Predicated region
    $region2: #{tpu_custom_call.1} parent=1 // pred_check
      _
    $region3: #{tpu_custom_call.1} parent=1 // pred_check_branch
      %13 = sbr.rel (0) target = $region5
    $region4: #{tpu_custom_call.1} parent=1 // pred_region
      %15 = vsyncadd [#allocation4], 0
      %s16 = sshll.u32 %s0, 4
      %s17 = int_to_ptr.hbm [resolvable:$true] %s16
      %s18 = sshll.u32 [#allocation3], 4
      %s19 = int_to_ptr.vmem [resolvable:$true] %s18
      %24 = dma.hbm_to_vmem [thread:$0]  %s17, 256, %s19, [#allocation4], 32, 32, 2
    $region5: #{tpu_custom_call.1} parent=1 // pred_fallthru
      _
    // Predicated region
    $region6: #{tpu_custom_call.1} parent=1 // pred_check
      _
    $region7: #{tpu_custom_call.1} parent=1 // pred_check_branch
      %26 = sbr.rel (0) target = $region9
    $region8: #{tpu_custom_call.1} parent=1 // pred_region
      _
    $region9: #{tpu_custom_call.1} parent=1 // pred_fallthru
      _
    // Predicated region
    $region10: #{tpu_custom_call.1} parent=1 // pred_check
      _
    $region11: #{tpu_custom_call.1} parent=1 // pred_check_branch
      %28 = sbr.rel (0) target = $region13
    $region12: #{tpu_custom_call.1} parent=1 // pred_region
      _
    $region13: #{tpu_custom_call.1} parent=1 // pred_fallthru
      _
    // Predicated region
    $region14: #{tpu_custom_call.1} parent=1 // pred_check
      _
    $region15: #{tpu_custom_call.1} parent=1 // pred_check_branch
      %30 = sbr.rel (0) target = $region17
    $region16: #{tpu_custom_call.1} parent=1 // pred_region
      _
    $region17: #{tpu_custom_call.1} parent=1 // pred_fallthru
      _
    // Predicated region
    $region18: #{tpu_custom_call.1} parent=1 // pred_check
      _
    $region19: #{tpu_custom_call.1} parent=1 // pred_check_branch
      %32 = sbr.rel (0) target = $region21
    $region20: #{tpu_custom_call.1} parent=1 // pred_region
      %34 = dma.done [#allocation4], 256
    $region21: #{tpu_custom_call.1} parent=1 // pred_fallthru
      _
    %v35 = vld [vmem:[%s1] sm:$0xff]
    %v36 = vld [vmem:[%s1 + $0x8] sm:$0xff]
    %v37 = vld [vmem:[%s1 + $0x10] sm:$0xff]
    %v38 = vld [vmem:[%s1 + $0x18] sm:$0xff]
    %v39 = vld [vmem:[%s2] sm:$0xff]
    %v40 = vld [vmem:[%s2 + $0x8] sm:$0xff]
    %v41 = vld [vmem:[%s2 + $0x10] sm:$0xff]
    %v42 = vld [vmem:[%s2 + $0x18] sm:$0xff]
    %v43 = vld [vmem:[#allocation3] sm:$0x3]
    %vm44 = vcmask 261120
    %v46 = vsel %vm44, 0.0, 0
    %48 = vmatpush.msra.mxu0 0.0
    %49 = vmatpush.msra.mxu0 0.0
    %50 = vmatpush.msra.mxu0 0.0
    %51 = vmatpush.msra.mxu0 0.0
    %52 = vmatpush.msra.mxu0 0.0
    %53 = vmatpush.msra.mxu0 0.0
    %54 = vmatpush.msra.mxu0 0.0
    %55 = vmatpush.msra.mxu0 0.0
    %56 = vmatpush.msra.mxu0 0.0
    %57 = vmatpush.msra.mxu0 0.0
    %58 = vmatpush.msra.mxu0 0.0
    %59 = vmatpush.msra.mxu0 0.0
    %60 = vmatpush.msra.mxu0 %v38
    %61 = vmatpush.msra.mxu0 %v37
    %62 = vmatpush.msra.mxu0 %v36
    %63 = vmatpush.msra.mxu0 %v35
    %64 = vmatmul.f32.gmra.mxu0 %v46
    %v65 = vpop.f32.mrf.mxu0
    %v66 = vadd.f32 0.0, %v65
    %67 = vdwg.mxu0
    %v68 = vadd.f32 %v43, %v66
    %v69 = vmul.f32 %v68, 0.5
    %v70 = vtanh.pop %v69
    %v71 = vadd.f32 %v70, 1.0
    %v72 = vmul.f32 %v71, 0.5
    %v73 = vtanh.pop %v68
    %v74 = vmul.f32 %v72, 0.0
    %76 = vrot.lane.b32.xlu0 %v73, 32
    %v77 = vpop.permute.xlu0 %76
    %v79 = vmul.f32 %v72, %v77
    %81 = vrot.lane.b32.xlu0 %v79, 32
    %v82 = vpop.permute.xlu0 %81
    %v84 = vadd.f32 %v74, %v82
    %v85 = vtanh.pop %v84
    %87 = vrot.lane.b32.xlu0 %v85, 32
    %v88 = vpop.permute.xlu0 %87
    %v90 = vmul.f32 %v72, %v88
    %s91 = scalar_lea.vmem [#allocation3], 2
    %v92 = vld [vmem:[%s91] sm:$0x3]
    %94 = vrot.lane.b32.xlu0 %v90, 64
    %v95 = vpop.permute.xlu0 %94
    %v96 = vsel %vm44, %v95, 0
    %98 = vmatpush.msra.mxu0 0.0
    %99 = vmatpush.msra.mxu0 0.0
    %100 = vmatpush.msra.mxu0 0.0
    %101 = vmatpush.msra.mxu0 0.0
    %102 = vmatpush.msra.mxu0 0.0
    %103 = vmatpush.msra.mxu0 0.0
    %104 = vmatpush.msra.mxu0 0.0
    %105 = vmatpush.msra.mxu0 0.0
    %106 = vmatpush.msra.mxu0 0.0
    %107 = vmatpush.msra.mxu0 0.0
    %108 = vmatpush.msra.mxu0 0.0
    %109 = vmatpush.msra.mxu0 0.0
    %110 = vmatpush.msra.mxu0 %v38
    %111 = vmatpush.msra.mxu0 %v37
    %112 = vmatpush.msra.mxu0 %v36
    %113 = vmatpush.msra.mxu0 %v35
    %114 = vmatmul.f32.gmra.mxu0 %v96
    %v115 = vpop.f32.mrf.mxu0
    %v116 = vadd.f32 0.0, %v115
    %117 = vdwg.mxu0
    %v118 = vadd.f32 %v92, %v116
    %v119 = vmul.f32 %v118, 0.5
    %v120 = vtanh.pop %v119
    %v121 = vadd.f32 %v120, 1.0
    %v122 = vmul.f32 %v121, 0.5
    %v123 = vtanh.pop %v118
    %v124 = vmul.f32 %v122, %v84
    %126 = vrot.lane.b32.xlu0 %v123, 32
    %v127 = vpop.permute.xlu0 %126
    %v129 = vmul.f32 %v122, %v127
    %131 = vrot.lane.b32.xlu0 %v129, 32
    %v132 = vpop.permute.xlu0 %131
    %v134 = vadd.f32 %v124, %v132
    %v135 = vtanh.pop %v134
    %137 = vrot.lane.b32.xlu0 %v135, 32
    %v138 = vpop.permute.xlu0 %137
    %v140 = vmul.f32 %v122, %v138
    %s141 = scalar_lea.vmem [#allocation3], 4
    %v142 = vld [vmem:[%s141] sm:$0x3]
    %144 = vrot.lane.b32.xlu0 %v140, 64
    %v145 = vpop.permute.xlu0 %144
    %v146 = vsel %vm44, %v145, 0
    %148 = vmatpush.msra.mxu0 0.0
    %149 = vmatpush.msra.mxu0 0.0
    %150 = vmatpush.msra.mxu0 0.0
    %151 = vmatpush.msra.mxu0 0.0
    %152 = vmatpush.msra.mxu0 0.0
    %153 = vmatpush.msra.mxu0 0.0
    %154 = vmatpush.msra.mxu0 0.0
    %155 = vmatpush.msra.mxu0 0.0
    %156 = vmatpush.msra.mxu0 0.0
    %157 = vmatpush.msra.mxu0 0.0
    %158 = vmatpush.msra.mxu0 0.0
    %159 = vmatpush.msra.mxu0 0.0
    %160 = vmatpush.msra.mxu0 %v38
    %161 = vmatpush.msra.mxu0 %v37
    %162 = vmatpush.msra.mxu0 %v36
    %163 = vmatpush.msra.mxu0 %v35
    %164 = vmatmul.f32.gmra.mxu0 %v146
    %v165 = vpop.f32.mrf.mxu0
    %v166 = vadd.f32 0.0, %v165
    %167 = vdwg.mxu0
    %v168 = vadd.f32 %v142, %v166
    %v169 = vmul.f32 %v168, 0.5
    %v170 = vtanh.pop %v169
    %v171 = vadd.f32 %v170, 1.0
    %v172 = vmul.f32 %v171, 0.5
    %v173 = vtanh.pop %v168
    %v174 = vmul.f32 %v172, %v134
    %176 = vrot.lane.b32.xlu0 %v173, 32
    %v177 = vpop.permute.xlu0 %176
    %v179 = vmul.f32 %v172, %v177
    %181 = vrot.lane.b32.xlu0 %v179, 32
    %v182 = vpop.permute.xlu0 %181
    %v184 = vadd.f32 %v174, %v182
    %v185 = vtanh.pop %v184
    %187 = vrot.lane.b32.xlu0 %v185, 32
    %v188 = vpop.permute.xlu0 %187
    %v190 = vmul.f32 %v172, %v188
    %s191 = scalar_lea.vmem [#allocation3], 6
    %v192 = vld [vmem:[%s191] sm:$0x3]
    %194 = vrot.lane.b32.xlu0 %v190, 64
    %v195 = vpop.permute.xlu0 %194
    %v196 = vsel %vm44, %v195, 0
    %198 = vmatpush.msra.mxu0 0.0
    %199 = vmatpush.msra.mxu0 0.0
    %200 = vmatpush.msra.mxu0 0.0
    %201 = vmatpush.msra.mxu0 0.0
    %202 = vmatpush.msra.mxu0 0.0
    %203 = vmatpush.msra.mxu0 0.0
    %204 = vmatpush.msra.mxu0 0.0
    %205 = vmatpush.msra.mxu0 0.0
    %206 = vmatpush.msra.mxu0 0.0
    %207 = vmatpush.msra.mxu0 0.0
    %208 = vmatpush.msra.mxu0 0.0
    %209 = vmatpush.msra.mxu0 0.0
    %210 = vmatpush.msra.mxu0 %v38
    %211 = vmatpush.msra.mxu0 %v37
    %212 = vmatpush.msra.mxu0 %v36
    %213 = vmatpush.msra.mxu0 %v35
    %214 = vmatmul.f32.gmra.mxu0 %v196
    %v215 = vpop.f32.mrf.mxu0
    %v216 = vadd.f32 0.0, %v215
    %217 = vdwg.mxu0
    %v218 = vadd.f32 %v192, %v216
    %v219 = vmul.f32 %v218, 0.5
    %v220 = vtanh.pop %v219
    %v221 = vadd.f32 %v220, 1.0
    %v222 = vmul.f32 %v221, 0.5
    %v223 = vtanh.pop %v218
    %v224 = vmul.f32 %v222, %v184
    %226 = vrot.lane.b32.xlu0 %v223, 32
    %v227 = vpop.permute.xlu0 %226
    %v229 = vmul.f32 %v222, %v227
    %231 = vrot.lane.b32.xlu0 %v229, 32
    %v232 = vpop.permute.xlu0 %231
    %v234 = vadd.f32 %v224, %v232
    %v235 = vtanh.pop %v234
    %237 = vrot.lane.b32.xlu0 %v235, 32
    %v238 = vpop.permute.xlu0 %237
    %v240 = vmul.f32 %v222, %v238
    %s241 = scalar_lea.vmem [#allocation3], 8
    %v242 = vld [vmem:[%s241] sm:$0x3]
    %244 = vrot.lane.b32.xlu0 %v240, 64
    %v245 = vpop.permute.xlu0 %244
    %v246 = vsel %vm44, %v245, 0
    %248 = vmatpush.msra.mxu0 0.0
    %249 = vmatpush.msra.mxu0 0.0
    %250 = vmatpush.msra.mxu0 0.0
    %251 = vmatpush.msra.mxu0 0.0
    %252 = vmatpush.msra.mxu0 0.0
    %253 = vmatpush.msra.mxu0 0.0
    %254 = vmatpush.msra.mxu0 0.0
    %255 = vmatpush.msra.mxu0 0.0
    %256 = vmatpush.msra.mxu0 0.0
    %257 = vmatpush.msra.mxu0 0.0
    %258 = vmatpush.msra.mxu0 0.0
    %259 = vmatpush.msra.mxu0 0.0
    %260 = vmatpush.msra.mxu0 %v38
    %261 = vmatpush.msra.mxu0 %v37
    %262 = vmatpush.msra.mxu0 %v36
    %263 = vmatpush.msra.mxu0 %v35
    %264 = vmatmul.f32.gmra.mxu0 %v246
    %v265 = vpop.f32.mrf.mxu0
    %v266 = vadd.f32 0.0, %v265
    %267 = vdwg.mxu0
    %v268 = vadd.f32 %v242, %v266
    %v269 = vmul.f32 %v268, 0.5
    %v270 = vtanh.pop %v269
    %v271 = vadd.f32 %v270, 1.0
    %v272 = vmul.f32 %v271, 0.5
    %v273 = vtanh.pop %v268
    %v274 = vmul.f32 %v272, %v234
    %276 = vrot.lane.b32.xlu0 %v273, 32
    %v277 = vpop.permute.xlu0 %276
    %v279 = vmul.f32 %v272, %v277
    %281 = vrot.lane.b32.xlu0 %v279, 32
    %v282 = vpop.permute.xlu0 %281
    %v284 = vadd.f32 %v274, %v282
    %v285 = vtanh.pop %v284
    %287 = vrot.lane.b32.xlu0 %v285, 32
    %v288 = vpop.permute.xlu0 %287
    %v290 = vmul.f32 %v272, %v288
    %s291 = scalar_lea.vmem [#allocation3], 10
    %v292 = vld [vmem:[%s291] sm:$0x3]
    %294 = vrot.lane.b32.xlu0 %v290, 64
    %v295 = vpop.permute.xlu0 %294
    %v296 = vsel %vm44, %v295, 0
    %298 = vmatpush.msra.mxu0 0.0
    %299 = vmatpush.msra.mxu0 0.0
    %300 = vmatpush.msra.mxu0 0.0
    %301 = vmatpush.msra.mxu0 0.0
    %302 = vmatpush.msra.mxu0 0.0
    %303 = vmatpush.msra.mxu0 0.0
    %304 = vmatpush.msra.mxu0 0.0
    %305 = vmatpush.msra.mxu0 0.0
    %306 = vmatpush.msra.mxu0 0.0
    %307 = vmatpush.msra.mxu0 0.0
    %308 = vmatpush.msra.mxu0 0.0
    %309 = vmatpush.msra.mxu0 0.0
    %310 = vmatpush.msra.mxu0 %v38
    %311 = vmatpush.msra.mxu0 %v37
    %312 = vmatpush.msra.mxu0 %v36
    %313 = vmatpush.msra.mxu0 %v35
    %314 = vmatmul.f32.gmra.mxu0 %v296
    %v315 = vpop.f32.mrf.mxu0
    %v316 = vadd.f32 0.0, %v315
    %317 = vdwg.mxu0
    %v318 = vadd.f32 %v292, %v316
    %v319 = vmul.f32 %v318, 0.5
    %v320 = vtanh.pop %v319
    %v321 = vadd.f32 %v320, 1.0
    %v322 = vmul.f32 %v321, 0.5
    %v323 = vtanh.pop %v318
    %v324 = vmul.f32 %v322, %v284
    %326 = vrot.lane.b32.xlu0 %v323, 32
    %v327 = vpop.permute.xlu0 %326
    %v329 = vmul.f32 %v322, %v327
    %331 = vrot.lane.b32.xlu0 %v329, 32
    %v332 = vpop.permute.xlu0 %331
    %v334 = vadd.f32 %v324, %v332
    %v335 = vtanh.pop %v334
    %337 = vrot.lane.b32.xlu0 %v335, 32
    %v338 = vpop.permute.xlu0 %337
    %v340 = vmul.f32 %v322, %v338
    %s341 = scalar_lea.vmem [#allocation3], 12
    %v342 = vld [vmem:[%s341] sm:$0x3]
    %344 = vrot.lane.b32.xlu0 %v340, 64
    %v345 = vpop.permute.xlu0 %344
    %v346 = vsel %vm44, %v345, 0
    %348 = vmatpush.msra.mxu0 0.0
    %349 = vmatpush.msra.mxu0 0.0
    %350 = vmatpush.msra.mxu0 0.0
    %351 = vmatpush.msra.mxu0 0.0
    %352 = vmatpush.msra.mxu0 0.0
    %353 = vmatpush.msra.mxu0 0.0
    %354 = vmatpush.msra.mxu0 0.0
    %355 = vmatpush.msra.mxu0 0.0
    %356 = vmatpush.msra.mxu0 0.0
    %357 = vmatpush.msra.mxu0 0.0
    %358 = vmatpush.msra.mxu0 0.0
    %359 = vmatpush.msra.mxu0 0.0
    %360 = vmatpush.msra.mxu0 %v38
    %361 = vmatpush.msra.mxu0 %v37
    %362 = vmatpush.msra.mxu0 %v36
    %363 = vmatpush.msra.mxu0 %v35
    %364 = vmatmul.f32.gmra.mxu0 %v346
    %v365 = vpop.f32.mrf.mxu0
    %v366 = vadd.f32 0.0, %v365
    %367 = vdwg.mxu0
    %v368 = vadd.f32 %v342, %v366
    %v369 = vmul.f32 %v368, 0.5
    %v370 = vtanh.pop %v369
    %v371 = vadd.f32 %v370, 1.0
    %v372 = vmul.f32 %v371, 0.5
    %v373 = vtanh.pop %v368
    %v374 = vmul.f32 %v372, %v334
    %376 = vrot.lane.b32.xlu0 %v373, 32
    %v377 = vpop.permute.xlu0 %376
    %v379 = vmul.f32 %v372, %v377
    %381 = vrot.lane.b32.xlu0 %v379, 32
    %v382 = vpop.permute.xlu0 %381
    %v384 = vadd.f32 %v374, %v382
    %v385 = vtanh.pop %v384
    %387 = vrot.lane.b32.xlu0 %v385, 32
    %v388 = vpop.permute.xlu0 %387
    %v390 = vmul.f32 %v372, %v388
    %s391 = scalar_lea.vmem [#allocation3], 14
    %v392 = vld [vmem:[%s391] sm:$0x3]
    %394 = vrot.lane.b32.xlu0 %v390, 64
    %v395 = vpop.permute.xlu0 %394
    %v396 = vsel %vm44, %v395, 0
    %398 = vmatpush.msra.mxu0 0.0
    %399 = vmatpush.msra.mxu0 0.0
    %400 = vmatpush.msra.mxu0 0.0
    %401 = vmatpush.msra.mxu0 0.0
    %402 = vmatpush.msra.mxu0 0.0
    %403 = vmatpush.msra.mxu0 0.0
    %404 = vmatpush.msra.mxu0 0.0
    %405 = vmatpush.msra.mxu0 0.0
    %406 = vmatpush.msra.mxu0 0.0
    %407 = vmatpush.msra.mxu0 0.0
    %408 = vmatpush.msra.mxu0 0.0
    %409 = vmatpush.msra.mxu0 0.0
    %410 = vmatpush.msra.mxu0 %v38
    %411 = vmatpush.msra.mxu0 %v37
    %412 = vmatpush.msra.mxu0 %v36
    %413 = vmatpush.msra.mxu0 %v35
    %414 = vmatmul.f32.gmra.mxu0 %v396
    %v415 = vpop.f32.mrf.mxu0
    %v416 = vadd.f32 0.0, %v415
    %417 = vdwg.mxu0
    %v418 = vadd.f32 %v392, %v416
    %v419 = vmul.f32 %v418, 0.5
    %v420 = vtanh.pop %v419
    %v421 = vadd.f32 %v420, 1.0
    %v422 = vmul.f32 %v421, 0.5
    %v423 = vtanh.pop %v418
    %v424 = vmul.f32 %v422, %v384
    %426 = vrot.lane.b32.xlu0 %v423, 32
    %v427 = vpop.permute.xlu0 %426
    %v429 = vmul.f32 %v422, %v427
    %431 = vrot.lane.b32.xlu0 %v429, 32
    %v432 = vpop.permute.xlu0 %431
    %v434 = vadd.f32 %v424, %v432
    %v435 = vtanh.pop %v434
    %437 = vrot.lane.b32.xlu0 %v435, 32
    %v438 = vpop.permute.xlu0 %437
    %v440 = vmul.f32 %v422, %v438
    %v441 = vld [vmem:[#allocation2] sm:$0x1]
    %v443 = vperm.slane %v441, 0
    %446 = vrot.lane.b32.xlu0 %v440, 64
    %v447 = vpop.permute.xlu0 %446
    %v448 = vsel %vm44, %v447, 0
    %450 = vmatpush.msra.mxu0 0.0
    %451 = vmatpush.msra.mxu0 0.0
    %452 = vmatpush.msra.mxu0 0.0
    %453 = vmatpush.msra.mxu0 0.0
    %454 = vmatpush.msra.mxu0 0.0
    %455 = vmatpush.msra.mxu0 0.0
    %456 = vmatpush.msra.mxu0 0.0
    %457 = vmatpush.msra.mxu0 0.0
    %458 = vmatpush.msra.mxu0 0.0
    %459 = vmatpush.msra.mxu0 0.0
    %460 = vmatpush.msra.mxu0 0.0
    %461 = vmatpush.msra.mxu0 0.0
    %462 = vmatpush.msra.mxu0 %v42
    %463 = vmatpush.msra.mxu0 %v41
    %464 = vmatpush.msra.mxu0 %v40
    %465 = vmatpush.msra.mxu0 %v39
    %466 = vmatmul.f32.gmra.mxu0 %v448
    %v467 = vpop.f32.mrf.mxu0
    %v468 = vadd.f32 %v443, %v467
    %469 = vdwg.mxu0
    %vm470 = vcmask 1024
    %471 = vst.msk [vmem:[%s4] sm:$0x3] %vm470, %v468
    // Predicated region
    $region22: #{tpu_custom_call.1} parent=1 // pred_check
      _
    $region23: #{tpu_custom_call.1} parent=1 // pred_check_branch
      %473 = sbr.rel (0) target = $region25
    $region24: #{tpu_custom_call.1} parent=1 // pred_region
      _
    $region25: #{tpu_custom_call.1} parent=1 // pred_fallthru
      _
    // Predicated region
    $region26: #{tpu_custom_call.1} parent=1 // pred_check
      _
    $region27: #{tpu_custom_call.1} parent=1 // pred_check_branch
      %475 = sbr.rel (0) target = $region29
    $region28: #{tpu_custom_call.1} parent=1 // pred_region
      _
    $region29: #{tpu_custom_call.1} parent=1 // pred_fallthru
      _
    %476 = vsyncpa [#allocation4], 1

</llo_original>
